<compile_context>
chip_gen: v5e
topology: v5e:2x2
jax: 0.10.0
libtpu: 0.0.40
codegen_flags: <defaults>
</compile_context>

<pallas_src>
import functools

import jax
import jax.numpy as jnp
from jax.experimental import pallas as pl
from jax.experimental.pallas import tpu as pltpu

_TARGET_BLOCK_BYTES = 4 * 1024 * 1024   # per pipelined buffer
_VMEM_LIMIT_BYTES = 32 * 1024 * 1024    # <= physical VMEM on v5e/v6e/v7x


def _sublane_multiple(*dtypes):
    """Minimum legal sublane multiple: f32 -> 8, bf16/f16 -> 16, int8/fp8 -> 32."""
    min_itemsize = min(jnp.dtype(d).itemsize for d in dtypes)
    return max(8, 32 // max(1, min_itemsize))


def _block_dims(rows, cols, itemsize, sub_mult):
    """Pick (BR, BC): multiples of (sub_mult, 128) or full extent, within budget."""
    max_cols = max(128, (_TARGET_BLOCK_BYTES // (sub_mult * itemsize)) // 128 * 128)
    bc = cols if cols <= max_cols else max_cols
    max_rows = max(
        sub_mult,
        (_TARGET_BLOCK_BYTES // (max(bc, 1) * itemsize)) // sub_mult * sub_mult,
    )
    br = rows if rows <= max_rows else max_rows
    return br, bc


def _split_for_megacore(rows, cols, br, bc, sub_mult):
    """Guarantee >= 2 grid steps so 'parallel' axes can shard across v7x's 2 cores."""
    if pl.cdiv(rows, br) * pl.cdiv(cols, bc) > 1:
        return br, bc
    if cols > 128:
        half = pl.cdiv(pl.cdiv(cols, 2), 128) * 128
        return br, min(bc, half)
    if rows > sub_mult:
        half = pl.cdiv(pl.cdiv(rows, 2), sub_mult) * sub_mult
        return min(br, half), bc
    return br, bc


def _normalize_kernel(x_ref, scale_ref, bias_ref, o_ref, *, num_channels, block_rows):
    # x_ref / o_ref: (BR, BC) VMEM tiles of the collapsed (N*C, H*W) view.
    # scale_ref / bias_ref: (C,) SMEM scalars holding 1/std and -mean/std.
    # Row r belongs to channel (r % C); rebuild per-row coefficients from a sublane
    # iota so no lane-padded (BR, 1) VMEM operands or extra DMAs are needed.
    row0 = pl.program_id(0) * block_rows
    br = x_ref.shape[0]
    ch = (jax.lax.broadcasted_iota(jnp.int32, (br, 1), 0) + row0) % num_channels
    scale = jnp.where(ch == 0, scale_ref[0], 0.0).astype(jnp.float32)
    bias = jnp.where(ch == 0, bias_ref[0], 0.0).astype(jnp.float32)
    for c in range(1, num_channels):
        sel = ch == c
        scale = jnp.where(sel, scale_ref[c], scale)
        bias = jnp.where(sel, bias_ref[c], bias)
    x = x_ref[...].astype(jnp.float32)
    o_ref[...] = (x * scale + bias).astype(o_ref.dtype)


def normalize(x, mean, std):
    """Pallas equivalent of (x - mean[None, :, None, None]) / std[None, :, None, None]."""
    N, C, H, W = x.shape
    assert mean.shape == (C,) and std.shape == (C,)

    # PyTorch's forward requires a floating x; promote non-float inputs to f32 output.
    out_dtype = x.dtype if jnp.issubdtype(x.dtype, jnp.floating) else jnp.float32

    inv_std = 1.0 / std.astype(jnp.float32)        # divide done once on C scalars
    bias = (-mean.astype(jnp.float32)) * inv_std   # y = x * inv_std + bias

    rows = N * C
    cols = H * W
    x2 = x.reshape(rows, cols)                     # free view for contiguous NCHW

    in_item = jnp.dtype(x.dtype).itemsize
    out_item = jnp.dtype(out_dtype).itemsize
    sub_mult = _sublane_multiple(x.dtype, out_dtype)
    br, bc = _block_dims(rows, cols, max(in_item, out_item), sub_mult)
    br, bc = _split_for_megacore(rows, cols, br, bc, sub_mult)
    # Row axis stays the OUTER grid dim (keep it that way: SMEM coeffs are grid-
    # invariant, and reordering would not help a pure streaming kernel).
    grid = (pl.cdiv(rows, br), pl.cdiv(cols, bc))

    kernel = functools.partial(_normalize_kernel, num_channels=C, block_rows=br)

    out2 = pl.pallas_call(
        kernel,
        out_shape=jax.ShapeDtypeStruct((rows, cols), out_dtype),
        grid=grid,
        in_specs=[
            pl.BlockSpec((br, bc), lambda i, j: (i, j)),            # x tile
            pl.BlockSpec(memory_space=pltpu.MemorySpace.SMEM),      # (C,) 1/std
            pl.BlockSpec(memory_space=pltpu.MemorySpace.SMEM),      # (C,) -mean/std
        ],
        out_specs=pl.BlockSpec((br, bc), lambda i, j: (i, j)),
        compiler_params=pltpu.CompilerParams(
            dimension_semantics=("parallel", "parallel"),
            vmem_limit_bytes=_VMEM_LIMIT_BYTES,
        ),
        cost_estimate=pl.CostEstimate(
            flops=2 * rows * cols,
            transcendentals=0,
            bytes_accessed=rows * cols * (in_item + out_item) + 2 * C * 4,
        ),
    )(x2, inv_std, bias)

    return out2.reshape(N, C, H, W)


if __name__ == "__main__":
    # Module registers 3-channel mean/std buffers (ImageNet constants).
    mean = jnp.array([0.485, 0.456, 0.406], dtype=jnp.float32)
    std = jnp.array([0.229, 0.224, 0.225], dtype=jnp.float32)

    key = jax.random.PRNGKey(0)
    x = jax.random.uniform(key, (2, 3, 16, 16), dtype=jnp.float32)

    out = jax.jit(normalize)(x, mean, std)
    out = jax.block_until_ready(out)

    # Reference: plain JAX broadcasting, identical to the PyTorch forward.
    ref = (x - mean.reshape(1, 3, 1, 1)) / std.reshape(1, 3, 1, 1)
    assert out.shape == x.shape and out.dtype == x.dtype
    assert jnp.allclose(out, ref, atol=1e-6, rtol=1e-6)

    print("KERNEL_OK")
</pallas_src>

<mosaic_0001>
module attributes {stable_mosaic.version = 11 : i64} {
  func.func @_normalize_kernel(%arg0: i32, %arg1: i32, %arg2: memref<6x128xf32, #tpu.memory_space<vmem>>, %arg3: memref<3xf32, #tpu.memory_space<smem>>, %arg4: memref<3xf32, #tpu.memory_space<smem>>, %arg5: memref<6x128xf32, #tpu.memory_space<vmem>>) attributes {dimension_semantics = [#tpu.dimension_semantics<parallel>, #tpu.dimension_semantics<parallel>], iteration_bounds = array<i64: 1, 2>, scalar_prefetch = 0 : i64, scratch_operands = 0 : i64, tpu.core_type = #tpu.core_type<tc>, window_params = [{transform_indices = @transform_0, window_bounds = array<i64: 6, 128>}, {transform_indices = @transform_1, window_bounds = array<i64: 3>}, {transform_indices = @transform_2, window_bounds = array<i64: 3>}, {transform_indices = @transform_3, window_bounds = array<i64: 6, 128>}]} {
    %c6_i32 = arith.constant 6 : i32
    %0 = arith.muli %arg0, %c6_i32 : i32
    %1 = tpu.iota {dimensions = array<i32: 0>} : vector<6x1xi32>
    %2 = vector.broadcast %0 : i32 to vector<6x1xi32>
    %3 = arith.addi %1, %2 : vector<6x1xi32>
    %c3_i32 = arith.constant 3 : i32
    %c0_i32 = arith.constant 0 : i32
    %4 = arith.cmpi eq, %c3_i32, %c0_i32 : i32
    %c1_i32 = arith.constant 1 : i32
    %5 = arith.select %4, %c1_i32, %c3_i32 : i32
    %6 = vector.broadcast %5 : i32 to vector<6x1xi32>
    %7 = arith.remsi %3, %6 : vector<6x1xi32>
    %c0_i32_0 = arith.constant 0 : i32
    %8 = vector.broadcast %c0_i32_0 : i32 to vector<6x1xi32>
    %9 = arith.cmpi ne, %7, %8 : vector<6x1xi32>
    %c0_i32_1 = arith.constant 0 : i32
    %10 = vector.broadcast %c0_i32_1 : i32 to vector<6x1xi32>
    %11 = arith.cmpi slt, %7, %10 : vector<6x1xi32>
    %c0_i32_2 = arith.constant 0 : i32
    %12 = arith.cmpi slt, %5, %c0_i32_2 : i32
    %13 = vector.broadcast %12 : i1 to vector<6x1xi1>
    %14 = vector.broadcast %13 : vector<6x1xi1> to vector<6x1xi1>
    %15 = arith.xori %11, %14 : vector<6x1xi1>
    %16 = arith.andi %15, %9 : vector<6x1xi1>
    %17 = vector.broadcast %5 : i32 to vector<6x1xi32>
    %18 = arith.addi %7, %17 : vector<6x1xi32>
    %19 = arith.select %16, %18, %7 : vector<6x1xi1>, vector<6x1xi32>
    %c0_i32_3 = arith.constant 0 : i32
    %20 = vector.broadcast %c0_i32_3 : i32 to vector<6x1xi32>
    %21 = arith.cmpi eq, %19, %20 : vector<6x1xi32>
    %c0 = arith.constant 0 : index
    %22 = memref.load %arg3[%c0] : memref<3xf32, #tpu.memory_space<smem>>
    %cst = arith.constant 0.000000e+00 : f32
    %23 = vector.broadcast %22 : f32 to vector<6x1xf32>
    %24 = vector.broadcast %cst : f32 to vector<6x1xf32>
    %25 = arith.select %21, %23, %24 : vector<6x1xi1>, vector<6x1xf32>
    %c0_i32_4 = arith.constant 0 : i32
    %26 = vector.broadcast %c0_i32_4 : i32 to vector<6x1xi32>
    %27 = arith.cmpi eq, %19, %26 : vector<6x1xi32>
    %c0_5 = arith.constant 0 : index
    %28 = memref.load %arg4[%c0_5] : memref<3xf32, #tpu.memory_space<smem>>
    %cst_6 = arith.constant 0.000000e+00 : f32
    %29 = vector.broadcast %28 : f32 to vector<6x1xf32>
    %30 = vector.broadcast %cst_6 : f32 to vector<6x1xf32>
    %31 = arith.select %27, %29, %30 : vector<6x1xi1>, vector<6x1xf32>
    %c1_i32_7 = arith.constant 1 : i32
    %32 = vector.broadcast %c1_i32_7 : i32 to vector<6x1xi32>
    %33 = arith.cmpi eq, %19, %32 : vector<6x1xi32>
    %c1 = arith.constant 1 : index
    %34 = memref.load %arg3[%c1] : memref<3xf32, #tpu.memory_space<smem>>
    %35 = vector.broadcast %34 : f32 to vector<6x1xf32>
    %36 = arith.select %33, %35, %25 : vector<6x1xi1>, vector<6x1xf32>
    %c1_8 = arith.constant 1 : index
    %37 = memref.load %arg4[%c1_8] : memref<3xf32, #tpu.memory_space<smem>>
    %38 = vector.broadcast %37 : f32 to vector<6x1xf32>
    %39 = arith.select %33, %38, %31 : vector<6x1xi1>, vector<6x1xf32>
    %c2_i32 = arith.constant 2 : i32
    %40 = vector.broadcast %c2_i32 : i32 to vector<6x1xi32>
    %41 = arith.cmpi eq, %19, %40 : vector<6x1xi32>
    %c2 = arith.constant 2 : index
    %42 = memref.load %arg3[%c2] : memref<3xf32, #tpu.memory_space<smem>>
    %43 = vector.broadcast %42 : f32 to vector<6x1xf32>
    %44 = arith.select %41, %43, %36 : vector<6x1xi1>, vector<6x1xf32>
    %c2_9 = arith.constant 2 : index
    %45 = memref.load %arg4[%c2_9] : memref<3xf32, #tpu.memory_space<smem>>
    %46 = vector.broadcast %45 : f32 to vector<6x1xf32>
    %47 = arith.select %41, %46, %39 : vector<6x1xi1>, vector<6x1xf32>
    %c0_10 = arith.constant 0 : index
    %c0_11 = arith.constant 0 : index
    %48 = vector.load %arg2[%c0_10, %c0_11] : memref<6x128xf32, #tpu.memory_space<vmem>>, vector<6x128xf32>
    %49 = vector.broadcast %44 : vector<6x1xf32> to vector<6x128xf32>
    %50 = arith.mulf %48, %49 : vector<6x128xf32>
    %51 = vector.broadcast %47 : vector<6x1xf32> to vector<6x128xf32>
    %52 = arith.addf %50, %51 : vector<6x128xf32>
    %c0_12 = arith.constant 0 : index
    %c0_13 = arith.constant 0 : index
    %53 = vector.load %arg5[%c0_12, %c0_13] : memref<6x128xf32, #tpu.memory_space<vmem>>, vector<6x128xf32>
    tpu.vector_store %arg5[%c0_12, %c0_13], %52 {strides = array<i32>} : memref<6x128xf32, #tpu.memory_space<vmem>>, vector<6x128xf32>,
    return
  }
  func.func @transform_0(%arg0: i32, %arg1: i32) -> (i32, i32) {
    %c0_i32 = arith.constant 0 : i32
    return %arg0, %arg1 : i32, i32
  }
  func.func @transform_1(%arg0: i32, %arg1: i32) -> i32 {
    %c0_i32 = arith.constant 0 : i32
    %c0_i32_0 = arith.constant 0 : i32
    return %c0_i32 : i32
  }
  func.func @transform_2(%arg0: i32, %arg1: i32) -> i32 {
    %c0_i32 = arith.constant 0 : i32
    %c0_i32_0 = arith.constant 0 : i32
    return %c0_i32 : i32
  }
  func.func @transform_3(%arg0: i32, %arg1: i32) -> (i32, i32) {
    %c0_i32 = arith.constant 0 : i32
    return %arg0, %arg1 : i32, i32
  }
}

</mosaic_0001>

<llo_original>
// kernel: normalize.1
$region0: #{normalize.1}
  #allocation0 [shape = 'u32[]', space=smem, size = 0x4, offset = 0x4, fixed_abs, tag = 'smem constant byte address 0x4 - core index']
  #allocation1 [shape = 'u32[72,128]{1,0:T(1,128)}', space=vmem, size = 0x9000, scoped, tag = 'internal scratch']
  %s0 = inlined_call_operand.vmem [shape: f32[6,256], index: 0, kind: input, shape index: {}]
  %s1 = inlined_call_operand.vmem [shape: f32[3], index: 1, kind: input, shape index: {}]
  %s2 = inlined_call_operand.vmem [shape: f32[3], index: 2, kind: input, shape index: {}]
  %s3 = inlined_call_operand.vmem [shape: f32[6,256], index: 3, kind: output, shape index: {}]
  %s4 = sld [smem:[#allocation0]]
  $region53: #{normalize.1} parent=0
    _
  %s6 = ssub.s32 1, %s4
  %s7 = scalar_select 0, %s6, %s4
  $region1: #{normalize.1} parent=0
    #allocation2 [shape = 'u8[512]{0}', space=smem, size = 0x200, scoped, tag = 'input window, operand 1, single buffered']
    #allocation3 [shape = 's32[2]{0}', space=sflag, size = 0x8, scoped, tag = 'scoped memory for normalize.1']
    #allocation4 [shape = 'u8[512]{0}', space=smem, size = 0x200, scoped, tag = 'input window, operand 2, single buffered']
    #allocation5 [shape = 's32[1]{0}', space=sflag, size = 0x4, scoped, tag = 'scoped memory for normalize.1']
    %8 = vsyncpa [#allocation3], 0
    %9 = vsyncpa [#allocation5], 0
    loop: start=0, step=1, limit=4
    $region2: #{normalize.1} parent=1 // loop_pre_header
      _
    $region3: #{normalize.1} parent=1 // loop_header
      %s11 = sphi 0, %s15
      %p12 = scmp.ge.s32.totalorder %s11, 4
      %s18 = sphi 0, %s30
      %s19 = sphi 0, %s26
      %s20 = sphi 0, %s18
      %s21 = sphi 0, %s19
      %s22 = sphi 0, %s20
      %s23 = sphi 0, %s21
      %s35 = sphi 0, %s37
      %s38 = sphi 0, %s35
      %s39 = sphi 0, %s38
      %s55 = sphi 0, %s39
      %s59 = sphi 0, %s59
      %s61 = sphi 0, %s59
      %s62 = sphi 0, %s61
      %s76 = sphi 0, %s62
      %s80 = sphi 0, %s80
      %s82 = sphi 0, %s80
      %s83 = sphi 0, %s82
      %s97 = sphi 0, %s83
      %s105 = sphi 0, %s107
      %s108 = sphi 0, %s105
      %s109 = sphi 0, %s108
      %s125 = sphi 0, %s109
    $region4: #{normalize.1} parent=1 // loop_header_branch
      %14 = sbr.rel (%p12) target = $region8
    $region5: #{normalize.1} parent=1 // loop_body
      %s16 = ssub.s32 %s11, 1
      %s17 = ssub.s32 %s11, 2
      %s24 = sadd.s32 1, %s19
      %p25 = scmp.ge.s32.totalorder %s24, 2
      %s26 = scalar_select %p25, 0, %s24
      %s27 = sadd.s32 1, %s18
      %s28 = scalar_select %p25, %s27, %s18
      %p29 = scmp.ge.s32.totalorder %s28, 1
      %s30 = scalar_select %p29, 0, %s28
      %s31 = ssub.s32 %s18, %s30
      %s32 = ssub.s32 %s19, %s26
      %s33 = sor.u32 %s31, %s32
      %p34 = scmp.eq.s32.totalorder %s33, 0
      %s36 = sadd.s32 %s35, 1
      %s37 = scalar_select %p34, %s35, %s36
      %p40 = pneg %p34
      %p41 = scmp.eq.s32.totalorder %s11, 1
      %p42 = por %p40, %p41
      %p43 = scmp.ne.s32.totalorder %s35, %s38
      %p44 = scmp.eq.s32.totalorder %s11, 0
      %p45 = por %p43, %p44
      %p46 = scmp.ne.s32.totalorder %s35, %s38
      %p47 = scmp.eq.s32.totalorder %s16, 1
      %p48 = por %p46, %p47
      %p49 = scmp.ne.s32.totalorder %s38, %s39
      %p50 = scmp.eq.s32.totalorder %s16, 0
      %p51 = por %p49, %p50
      %p52 = scmp.ne.s32.totalorder %s38, %s39
      %p53 = scmp.eq.s32.totalorder %s17, 1
      %p54 = por %p52, %p53
      %p56 = scmp.ne.s32.totalorder %s39, %s55
      %p57 = scmp.eq.s32.totalorder %s17, 0
      %p58 = por %p56, %p57
      %s60 = sadd.s32 %s59, 1
      %p63 = scmp.eq.s32.totalorder %s11, 1
      %p64 = scmp.ne.s32.totalorder %s59, %s61
      %p65 = scmp.eq.s32.totalorder %s11, 0
      %p66 = por %p64, %p65
      %p67 = scmp.ne.s32.totalorder %s59, %s61
      %p68 = scmp.eq.s32.totalorder %s16, 1
      %p69 = por %p67, %p68
      %p70 = scmp.ne.s32.totalorder %s61, %s62
      %p71 = scmp.eq.s32.totalorder %s16, 0
      %p72 = por %p70, %p71
      %p73 = scmp.ne.s32.totalorder %s61, %s62
      %p74 = scmp.eq.s32.totalorder %s17, 1
      %p75 = por %p73, %p74
      %p77 = scmp.ne.s32.totalorder %s62, %s76
      %p78 = scmp.eq.s32.totalorder %s17, 0
      %p79 = por %p77, %p78
      %s81 = sadd.s32 %s80, 1
      %p84 = scmp.eq.s32.totalorder %s11, 1
      %p85 = scmp.ne.s32.totalorder %s80, %s82
      %p86 = scmp.eq.s32.totalorder %s11, 0
      %p87 = por %p85, %p86
      %p88 = scmp.ne.s32.totalorder %s80, %s82
      %p89 = scmp.eq.s32.totalorder %s16, 1
      %p90 = por %p88, %p89
      %p91 = scmp.ne.s32.totalorder %s82, %s83
      %p92 = scmp.eq.s32.totalorder %s16, 0
      %p93 = por %p91, %p92
      %p94 = scmp.ne.s32.totalorder %s82, %s83
      %p95 = scmp.eq.s32.totalorder %s17, 1
      %p96 = por %p94, %p95
      %p98 = scmp.ne.s32.totalorder %s83, %s97
      %p99 = scmp.eq.s32.totalorder %s17, 0
      %p100 = por %p98, %p99
      %s101 = ssub.s32 %s18, %s30
      %s102 = ssub.s32 %s19, %s26
      %s103 = sor.u32 %s101, %s102
      %p104 = scmp.eq.s32.totalorder %s103, 0
      %s106 = sadd.s32 %s105, 1
      %s107 = scalar_select %p104, %s105, %s106
      %p110 = pneg %p104
      %p111 = scmp.eq.s32.totalorder %s11, 1
      %p112 = por %p110, %p111
      %p113 = scmp.ne.s32.totalorder %s105, %s108
      %p114 = scmp.eq.s32.totalorder %s11, 0
      %p115 = por %p113, %p114
      %p116 = scmp.ne.s32.totalorder %s105, %s108
      %p117 = scmp.eq.s32.totalorder %s16, 1
      %p118 = por %p116, %p117
      %p119 = scmp.ne.s32.totalorder %s108, %s109
      %p120 = scmp.eq.s32.totalorder %s16, 0
      %p121 = por %p119, %p120
      %p122 = scmp.ne.s32.totalorder %s108, %s109
      %p123 = scmp.eq.s32.totalorder %s17, 1
      %p124 = por %p122, %p123
      %p126 = scmp.ne.s32.totalorder %s109, %s125
      %p127 = scmp.eq.s32.totalorder %s17, 0
      %p128 = por %p126, %p127
      %p129 = scmp.le.s32.totalorder 1, %s11
      %p130 = scmp.lt.s32.totalorder %s11, 3
      %p131 = pnand %p129, %p130
      %p132 = pneg %p131
      // Predicated region
      $region9: #{normalize.1} parent=5 // pred_check
        _
      $region10: #{normalize.1} parent=5 // pred_check_branch
        %134 = sbr.rel (%p131) target = $region12
      $region11: #{normalize.1} parent=5 // pred_region
        %s135 = ssub.s32 %s11, 1
        // Predicated region
        $region13: #{normalize.1} parent=11 // pred_check
          %p136 = pneg %p72
        $region14: #{normalize.1} parent=11 // pred_check_branch
          %138 = sbr.rel (%p136) target = $region16
        $region15: #{normalize.1} parent=11 // pred_region
          %140 = vsyncadd [#allocation3], 0
          %s142 = sshll.u32 %s1, 4
          %s143 = int_to_ptr.vmem [resolvable:$true] %s142
          %145 = dma.vmem_to_smem %s143, 16, [#allocation2], [#allocation3]
        $region16: #{normalize.1} parent=11 // pred_fallthru
          _
        // Predicated region
        $region17: #{normalize.1} parent=11 // pred_check
          %p146 = pneg %p93
        $region18: #{normalize.1} parent=11 // pred_check_branch
          %148 = sbr.rel (%p146) target = $region20
        $region19: #{normalize.1} parent=11 // pred_region
          %150 = vsyncadd [#allocation5], 0
          %s152 = sshll.u32 %s2, 4
          %s153 = int_to_ptr.vmem [resolvable:$true] %s152
          %155 = dma.vmem_to_smem %s153, 16, [#allocation4], [#allocation5]
        $region20: #{normalize.1} parent=11 // pred_fallthru
          _
      $region12: #{normalize.1} parent=5 // pred_fallthru
        _
      %p156 = scmp.lt.s32.totalorder %s11, 2
      // Predicated region
      $region21: #{normalize.1} parent=5 // pred_check
        %p157 = pneg %p156
      $region22: #{normalize.1} parent=5 // pred_check_branch
        %159 = sbr.rel (%p157) target = $region24
      $region23: #{normalize.1} parent=5 // pred_region
        // Predicated region
        $region25: #{normalize.1} parent=23 // pred_check
          %p160 = pneg %p45
        $region26: #{normalize.1} parent=23 // pred_check_branch
          %162 = sbr.rel (%p160) target = $region28
        $region27: #{normalize.1} parent=23 // pred_region
          %p163 = scmp.lt.s32.totalorder %s18, 0
          %s164 = scalar_select %p163, %s18, 0
          %p165 = scmp.lt.s32.totalorder %s19, 1
          %s166 = scalar_select %p165, %s19, 1
          %s167 = smul.addr %s164, 2
          %s168 = sadd.s32 %s166, %s167
          %s169 = smul.addr %s168, 8
          %s170 = scalar_lea.vmem %s0, %s169
        $region28: #{normalize.1} parent=23 // pred_fallthru
          _
      $region24: #{normalize.1} parent=5 // pred_fallthru
        _
      %p171 = scmp.le.s32.totalorder 1, %s11
      %p172 = scmp.lt.s32.totalorder %s11, 3
      %p173 = pnand %p171, %p172
      %p174 = pneg %p173
      // Predicated region
      $region29: #{normalize.1} parent=5 // pred_check
        _
      $region30: #{normalize.1} parent=5 // pred_check_branch
        %176 = sbr.rel (%p173) target = $region32
      $region31: #{normalize.1} parent=5 // pred_region
        %s177 = ssub.s32 %s11, 1
        // Predicated region
        $region33: #{normalize.1} parent=31 // pred_check
          %p178 = pneg %p72
        $region34: #{normalize.1} parent=31 // pred_check_branch
          %180 = sbr.rel (%p178) target = $region36
        $region35: #{normalize.1} parent=31 // pred_region
          %182 = dma.done [#allocation3], 16
        $region36: #{normalize.1} parent=31 // pred_fallthru
          _
        // Predicated region
        $region37: #{normalize.1} parent=31 // pred_check
          %p183 = pneg %p93
        $region38: #{normalize.1} parent=31 // pred_check_branch
          %185 = sbr.rel (%p183) target = $region40
        $region39: #{normalize.1} parent=31 // pred_region
          %187 = dma.done [#allocation5], 16
        $region40: #{normalize.1} parent=31 // pred_fallthru
          _
        %188 = sfence
        %p189 = scmp.lt.s32.totalorder %s20, 0
        %s190 = scalar_select %p189, %s20, 0
        %p191 = scmp.lt.s32.totalorder %s21, 1
        %s192 = scalar_select %p191, %s21, 1
        %s193 = smul.addr %s190, 2
        %s194 = sadd.s32 %s192, %s193
        %s195 = smul.addr %s194, 8
        %s196 = scalar_lea.vmem %s0, %s195
        %p197 = pneg %p51
        %p198 = pneg %p48
        %p199 = pneg %p72
        %p200 = pneg %p69
        %p201 = pneg %p93
        %p202 = pneg %p90
        %p203 = pneg %p121
        %p204 = pneg %p118
        %p205 = scmp.lt.s32.totalorder %s20, 0
        %s206 = scalar_select %p205, %s20, 0
        %p207 = scmp.lt.s32.totalorder %s21, 1
        %s208 = scalar_select %p207, %s21, 1
        %s209 = smul.addr %s206, 2
        %s210 = sadd.s32 %s208, %s209
        %s211 = smul.addr %s210, 8
        %s212 = scalar_lea.vmem %s3, %s211
        %p213 = scmp.lt.s32.totalorder %s20, 0
        %s214 = scalar_select %p213, %s20, 0
        %p215 = scmp.lt.s32.totalorder %s21, 1
        %s216 = scalar_select %p215, %s21, 1
        %s217 = smul.addr %s214, 2
        %s218 = sadd.s32 %s216, %s217
        %s219 = smul.addr %s218, 8
        %s220 = scalar_lea.vmem %s0, %s219
        %p221 = scmp.lt.s32.totalorder %s20, 0
        %s222 = scalar_select %p221, %s20, 0
        %p223 = scmp.lt.s32.totalorder %s21, 1
        %s224 = scalar_select %p223, %s21, 1
        %s225 = smul.addr %s222, 2
        %s226 = sadd.s32 %s224, %s225
        %s227 = smul.addr %s226, 8
        %s228 = scalar_lea.vmem %s3, %s227
        %s229 = smul.u32 %s20, 6
        %v230 = vlaneseq
        %v231 = vshrl.u32 %v230, 7
        %v232 = vstv %s229
        %v233 = vadd.s32 %v231, %v232
        %vm234 = vcmp.lt.s32.totalorder %v233, 0
        %v235 = vsub.s32 0, %v233
        %v236 = vsel %vm234, %v235, %v233
        %v237 = vand.u32 %v236, 65535
        %v238 = vshrl.u32 %v236, 16
        %v240 = vmul.u32 %v237, 43691
        %v241 = vmul.u32 %v237, 43690
        %v242 = vmul.u32 %v238, 43691
        %v243 = vmul.u32 %v238, 43690
        %v244 = vshll.u32 %v241, 16
        %v245 = vshrl.u32 %v241, 16
        %v246 = vshll.u32 %v242, 16
        %v247 = vshrl.u32 %v242, 16
        %vm248 = vc.u32 %v240, %v244
        %v249 = vsel %vm248, 1, 0
        %v250 = vadd.s32 %v240, %v244
        %v251 = vadd.s32 %v243, %v249
        %vm252 = vc.u32 %v250, %v246
        %v253 = vsel %vm252, 1, 0
        %v254 = vadd.s32 %v250, %v246
        %v255 = vadd.s32 %v251, %v253
        %v256 = vadd.s32 %v255, %v245
        %v257 = vadd.s32 %v256, %v247
        %v258 = vshrl.u32 %v257, 1
        %v259 = vmul.u32 %v258, 3
        %v260 = vsub.s32 %v236, %v259
        %v261 = vsub.s32 0, %v260
        %v262 = vsel %vm234, %v261, %v260
        %vm263 = vcmp.ne.s32.totalorder %v262, 0
        %vm264 = vcmp.lt.s32.totalorder %v262, 0
        %vm265 = vmand %vm264, %vm263
        %v266 = vadd.s32 %v262, 3
        %v267 = vsel %vm265, %v266, %v262
        %vm268 = vcmp.eq.s32.totalorder %v267, 0
        %s269 = sld [smem:[#allocation2]]
        %v270 = vstv %s269
        %v271 = vsel %vm268, %v270, 0.0
        %s272 = sld [smem:[#allocation4]]
        %v273 = vstv %s272
        %v274 = vsel %vm268, %v273, 0.0
        %vm275 = vcmp.eq.s32.totalorder %v267, 1
        %s276 = sld [smem:[#allocation2 + $0x1]]
        %v277 = vstv %s276
        %v278 = vsel %vm275, %v277, %v271
        %s279 = sld [smem:[#allocation4 + $0x1]]
        %v280 = vstv %s279
        %v281 = vsel %vm275, %v280, %v274
        %vm282 = vcmp.eq.s32.totalorder %v267, 2
        %s283 = sld [smem:[#allocation2 + $0x2]]
        %v284 = vstv %s283
        %v285 = vsel %vm282, %v284, %v278
        %s286 = sld [smem:[#allocation4 + $0x2]]
        %v287 = vstv %s286
        %v288 = vsel %vm282, %v287, %v281
        %v289 = vld [vmem:[%s220] sm:$0x3f]
        %v290 = vmul.f32 %v289, %v285
        %v291 = vadd.f32 %v290, %v288
        %292 = vst [vmem:[%s228] sm:$0x3f] %v291
        %p293 = scmp.lt.s32.totalorder %s20, 0
        %s294 = scalar_select %p293, %s20, 0
        %p295 = scmp.lt.s32.totalorder %s21, 1
        %s296 = scalar_select %p295, %s21, 1
        %s297 = smul.addr %s294, 2
        %s298 = sadd.s32 %s296, %s297
        %s299 = smul.addr %s298, 8
        %s300 = scalar_lea.vmem %s3, %s299
        // Predicated region
        $region41: #{normalize.1} parent=31 // pred_check
          %p301 = pneg %p118
        $region42: #{normalize.1} parent=31 // pred_check_branch
          %303 = sbr.rel (%p301) target = $region44
        $region43: #{normalize.1} parent=31 // pred_region
          _
        $region44: #{normalize.1} parent=31 // pred_fallthru
          _
      $region32: #{normalize.1} parent=5 // pred_fallthru
        _
      %p304 = scmp.le.s32.totalorder 2, %s11
      // Predicated region
      $region45: #{normalize.1} parent=5 // pred_check
        %p305 = pneg %p304
      $region46: #{normalize.1} parent=5 // pred_check_branch
        %307 = sbr.rel (%p305) target = $region48
      $region47: #{normalize.1} parent=5 // pred_region
        %s308 = ssub.s32 %s11, 2
        // Predicated region
        $region49: #{normalize.1} parent=47 // pred_check
          %p309 = pneg %p124
        $region50: #{normalize.1} parent=47 // pred_check_branch
          %311 = sbr.rel (%p309) target = $region52
        $region51: #{normalize.1} parent=47 // pred_region
          %p312 = scmp.lt.s32.totalorder %s22, 0
          %s313 = scalar_select %p312, %s22, 0
          %p314 = scmp.lt.s32.totalorder %s23, 1
          %s315 = scalar_select %p314, %s23, 1
          %s316 = smul.addr %s313, 2
          %s317 = sadd.s32 %s315, %s316
          %s318 = smul.addr %s317, 8
          %s319 = scalar_lea.vmem %s3, %s318
        $region52: #{normalize.1} parent=47 // pred_fallthru
          _
      $region48: #{normalize.1} parent=5 // pred_fallthru
        _
    $region6: #{normalize.1} parent=1 // loop_footer
      %s15 = sadd.s32 1, %s11
    $region7: #{normalize.1} parent=1 // loop_footer_branch
      %10 = sbr.rel target = $region3
    $region8: #{normalize.1} parent=1 // loop_exit
      _
    %320 = vsyncpa [#allocation3], 1
    %s321 = scalar_lea.sflag [#allocation3], 1
    %322 = vsyncpa %s321, 1
    %323 = vsyncpa [#allocation5], 1

</llo_original>
